<compile_context>
chip_gen: v6e
topology: v6e:2x2x1
jax: 0.10.0
libtpu: 0.0.40
codegen_flags: <defaults>
</compile_context>

<pallas_src>
import jax
import jax.numpy as jnp
from jax.experimental import pallas as pl
from jax.experimental.pallas import tpu as pltpu


def _event_critic_kernel(xT_ref, adj_ref, sd_ref, wws_ref, bw_ref, o_ref):
    """Both GAT branches + sigmoid + mlp partials in a single invocation.

    xT_ref : (2, F, Np)   bf16  node features, transposed (Np on lanes -> lane-dense)
    adj_ref: (2, B8, Np)  int8  incoming-edge mask of the per-graph self (last) nodes
    sd_ref : (2, B8, 1)   f32   precomputed dst scores  a_dst . (x_self @ W)
    wws_ref: (2, H+1, F)  bf16  rows 0..H-1 = W^T, row H = (W @ a_src)^T
    bw_ref : (2, 2, H)    f32   row 0 = GAT bias, row 1 = mlp weight row
    o_ref  : (B8, 1)      f32   sum over branches of  sigmoid(out) . W_mlp
    """
    H = bw_ref.shape[-1]
    acc = jnp.zeros(o_ref.shape, jnp.float32)
    for br in range(2):                          # static 2-way unroll: up / down branch
        xT = xT_ref[br]                          # (F, Np)  bf16
        wws = wws_ref[br]                        # (H+1, F) bf16
        bw = bw_ref[br]                          # (2, H)   f32

        # One MXU call yields h^T (rows :H) and the per-source scores (row H).
        hs = jnp.dot(wws, xT, preferred_element_type=jnp.float32)      # (H+1, Np)
        hT = hs[:H, :]                                                  # (H, Np)
        s_src = hs[H:H + 1, :]                                          # (1, Np)

        e = sd_ref[br] + s_src                                          # (B8, Np)
        e = jnp.maximum(e, 0.2 * e)                                     # LeakyReLU(0.2)
        mask = adj_ref[br].astype(jnp.float32) > 0.0                    # (B8, Np)
        e_m = jnp.where(mask, e, -1e30)                                 # scores stay f32
        row_max = jnp.max(e_m, axis=-1, keepdims=True)
        num = jnp.where(mask, jnp.exp(e_m - row_max), 0.0)
        den = jnp.sum(num, axis=-1, keepdims=True)
        den = jnp.where(den > 0.0, den, 1.0)    # no in-edges -> zero aggregation
        attn = num / den                         # exact divide: den is only (B8, 1)

        # out_b = sum_j attn[b, j] * h_j  ==  contract the lane (Np) axis of both.
        out = jax.lax.dot_general(attn, hT, (((1,), (1,)), ((), ())),
                                  preferred_element_type=jnp.float32)   # (B8, H)
        out = out + bw[0:1, :]                                          # GAT bias
        emb = jax.nn.sigmoid(out)
        # mlp is linear -> per-branch partial is a VPU multiply + lane reduction.
        acc = acc + jnp.sum(emb * bw[1:2, :], axis=-1, keepdims=True)   # (B8, 1)
    o_ref[...] = acc


def event_critic_net(up_x, up_adj, up_G, dn_x, dn_adj, dn_G, params):
    (Wu, asu, adu, bu, Wd, asd, add_, bd, Wm, bm) = params
    B = up_G.shape[0]
    F = up_x.shape[1]
    H = Wu.shape[1]

    B8 = ((B + 7) // 8) * 8                     # pad batch to the 8-sublane granularity
    Np = int(max(up_x.shape[0], dn_x.shape[0]))
    Np = ((Np + 127) // 128) * 128              # pad node axis to a lane-dense multiple

    def prep(x, adj, G, W, a_dst):
        # Pure XLA glue: gather per-graph "self" (last) rows, precompute s_dst, pad.
        n = x.shape[0]
        x = x.astype(jnp.float32)
        W = W.astype(jnp.float32)
        self_idx = jnp.argmax(G, axis=1)        # G rows are one-hot (cumsum - 1 gather)
        x_self = jnp.take(x, self_idx, axis=0)                              # (B, F)
        adj_self = jnp.take(adj.astype(jnp.float32), self_idx, axis=0)      # (B, n)
        s_dst = x_self @ (W @ a_dst.astype(jnp.float32)).reshape(F, 1)      # (B, 1)
        s_dst_p = jnp.zeros((B8, 1), jnp.float32).at[:B, :].set(s_dst)
        # Only the transposed, lane-dense feature layout is shipped (bf16).
        xT = jnp.zeros((F, Np), jnp.float32).at[:, :n].set(x.T).astype(jnp.bfloat16)
        adj_p = jnp.zeros((B8, Np), jnp.int8).at[:B, :n].set(
            (adj_self > 0).astype(jnp.int8))    # padded rows/cols masked out
        return xT, adj_p, s_dst_p

    uxT, uadj, usd = prep(up_x, up_adj, up_G, Wu, adu)
    dxT, dadj, dsd = prep(dn_x, dn_adj, dn_G, Wd, add_)

    # Per-branch (H+1, F): rows 0..H-1 = W^T, row H = (W @ a_src)^T  (parameter glue).
    def wws(W, a_src):
        W = W.astype(jnp.float32)
        return jnp.concatenate([W.T, (W @ a_src.astype(jnp.float32)).reshape(1, F)], 0)

    wws_st = jnp.stack([wws(Wu, asu), wws(Wd, asd)]).astype(jnp.bfloat16)   # (2, H+1, F)
    wm_row = Wm.astype(jnp.float32).reshape(H)
    bw_st = jnp.stack([
        jnp.stack([bu.astype(jnp.float32).reshape(H), wm_row]),
        jnp.stack([bd.astype(jnp.float32).reshape(H), wm_row]),
    ])                                                                       # (2, 2, H)

    xT_st = jnp.stack([uxT, dxT])       # (2, F, Np)  bf16
    adj_st = jnp.stack([uadj, dadj])    # (2, B8, Np) int8
    sd_st = jnp.stack([usd, dsd])       # (2, B8, 1)  f32

    vmem = pl.BlockSpec(memory_space=pltpu.MemorySpace.VMEM)
    partial = pl.pallas_call(
        _event_critic_kernel,
        out_shape=jax.ShapeDtypeStruct((B8, 1), jnp.float32),
        in_specs=[vmem, vmem, vmem, vmem, vmem],
        out_specs=vmem,
    )(xT_st, adj_st, sd_st, wws_st, bw_st)

    # mlp is linear: only its bias remains to be added; slice off the batch padding.
    return partial[:B] + bm.astype(jnp.float32).reshape(1, 1)


def _reference(up_x, up_adj, up_G, dn_x, dn_adj, dn_G, params):
    """Plain-JAX f32 reference with the un-folded GATConv parameters (full N x N path)."""
    (Wu, asu, adu, bu, Wd, asd, add_, bd, Wm, bm) = params

    def branch(x, adj, G, W, a_src, a_dst, b):
        h = x @ W
        s_src = h @ a_src
        s_dst = h @ a_dst
        e = s_dst[:, None] + s_src[None, :]
        e = jnp.where(e > 0, e, 0.2 * e)
        mask = adj > 0
        e_m = jnp.where(mask, e, -jnp.inf)
        row_max = jnp.max(jnp.where(mask, e, -1e30), axis=-1, keepdims=True)
        num = jnp.where(mask, jnp.exp(e_m - row_max), 0.0)
        den = jnp.sum(num, axis=-1, keepdims=True)
        attn = num / jnp.where(den > 0, den, 1.0)
        out = attn @ h + b
        return jax.nn.sigmoid(G @ out)

    x = branch(up_x, up_adj, up_G, Wu, asu, adu, bu) + \
        branch(dn_x, dn_adj, dn_G, Wd, asd, add_, bd)
    return x @ Wm + bm.reshape(1, 1)


if __name__ == "__main__":
    import numpy as np

    # Small synthetic problem: B graphs of nodes_per_graph nodes each.
    F = 8          # state_size
    H = 32         # hidden_size
    B = 4          # number of graphs in the batch
    npg = 4        # nodes per graph
    N = B * npg    # total nodes

    key = jax.random.PRNGKey(0)
    keys = jax.random.split(key, 12)

    up_x = jax.random.normal(keys[0], (N, F), dtype=jnp.float32)
    dn_x = jax.random.normal(keys[1], (N, F), dtype=jnp.float32)

    # Deterministic chain graphs: within each graph, edges k->k+1 and k+1->k.
    adj_np = np.zeros((N, N), dtype=np.float32)     # adj[dst, src]
    for g in range(B):
        base = g * npg
        for k in range(npg - 1):
            adj_np[base + k + 1, base + k] = 1.0    # k -> k+1
            adj_np[base + k, base + k + 1] = 1.0    # k+1 -> k
    up_adj = jnp.asarray(adj_np)
    dn_adj = jnp.asarray(adj_np)

    # self_index = cumsum(num_nodes_per_graph) - 1 -> last node of each graph (one-hot rows).
    self_idx = np.array([(g + 1) * npg - 1 for g in range(B)])
    G_np = np.zeros((B, N), dtype=np.float32)
    G_np[np.arange(B), self_idx] = 1.0
    up_G = jnp.asarray(G_np)
    dn_G = jnp.asarray(G_np)

    s = 0.1
    params = (
        s * jax.random.normal(keys[2], (F, H), dtype=jnp.float32),   # W_up
        s * jax.random.normal(keys[3], (H,), dtype=jnp.float32),     # att_src_up
        s * jax.random.normal(keys[4], (H,), dtype=jnp.float32),     # att_dst_up
        s * jax.random.normal(keys[5], (H,), dtype=jnp.float32),     # bias_up
        s * jax.random.normal(keys[6], (F, H), dtype=jnp.float32),   # W_down
        s * jax.random.normal(keys[7], (H,), dtype=jnp.float32),     # att_src_down
        s * jax.random.normal(keys[8], (H,), dtype=jnp.float32),     # att_dst_down
        s * jax.random.normal(keys[9], (H,), dtype=jnp.float32),     # bias_down
        s * jax.random.normal(keys[10], (H, 1), dtype=jnp.float32),  # mlp weight
        s * jax.random.normal(keys[11], (1,), dtype=jnp.float32),    # mlp bias
    )

    out = event_critic_net(up_x, up_adj, up_G, dn_x, dn_adj, dn_G, params)
    out = jax.block_until_ready(out)

    ref = _reference(up_x, up_adj, up_G, dn_x, dn_adj, dn_G, params)
    assert out.shape == (B, 1)
    # The softmax reciprocal is now exact; the only approximation left is the bf16
    # cast of the streamed node features (intentional HBM-bandwidth optimization),
    # which contributes ~1e-3-level error at these magnitudes.
    assert jnp.allclose(out, ref, atol=1e-2, rtol=1e-2), (out, ref)

    print("KERNEL_OK")
</pallas_src>

<mosaic_0001>
module attributes {stable_mosaic.version = 11 : i64} {
  func.func @_event_critic_kernel(%arg0: memref<2x8x128xbf16, #tpu.memory_space<vmem>>, %arg1: memref<2x8x128xi8, #tpu.memory_space<vmem>>, %arg2: memref<2x8x1xf32, #tpu.memory_space<vmem>>, %arg3: memref<2x33x8xbf16, #tpu.memory_space<vmem>>, %arg4: memref<2x2x32xf32, #tpu.memory_space<vmem>>, %arg5: memref<8x1xf32, #tpu.memory_space<vmem>>) attributes {dimension_semantics = [], scalar_prefetch = 0 : i64, scratch_operands = 0 : i64, tpu.core_type = #tpu.core_type<tc>} {
    %cst = arith.constant 0.000000e+00 : f32
    %0 = vector.broadcast %cst : f32 to vector<8x1xf32>
    %c0 = arith.constant 0 : index
    %c0_0 = arith.constant 0 : index
    %c0_1 = arith.constant 0 : index
    %1 = vector.load %arg0[%c0, %c0_0, %c0_1] : memref<2x8x128xbf16, #tpu.memory_space<vmem>>, vector<1x8x128xbf16>
    %2 = vector.shape_cast %1 : vector<1x8x128xbf16> to vector<8x128xbf16>
    %c0_2 = arith.constant 0 : index
    %c0_3 = arith.constant 0 : index
    %c0_4 = arith.constant 0 : index
    %3 = vector.load %arg3[%c0_2, %c0_3, %c0_4] : memref<2x33x8xbf16, #tpu.memory_space<vmem>>, vector<1x33x8xbf16>
    %4 = vector.shape_cast %3 : vector<1x33x8xbf16> to vector<33x8xbf16>
    %c0_5 = arith.constant 0 : index
    %c0_6 = arith.constant 0 : index
    %c0_7 = arith.constant 0 : index
    %5 = vector.load %arg4[%c0_5, %c0_6, %c0_7] : memref<2x2x32xf32, #tpu.memory_space<vmem>>, vector<1x2x32xf32>
    %6 = vector.shape_cast %5 : vector<1x2x32xf32> to vector<2x32xf32>
    %cst_8 = arith.constant dense<0.000000e+00> : vector<33x128xf32>
    %7 = tpu.matmul %4, %2, %cst_8 {dimension_numbers = #tpu.dot_dimension_numbers<[1], [0], [0], [1], [0, 0, 1, 1], [], []>} : vector<33x8xbf16>, vector<8x128xbf16>, vector<33x128xf32> -> vector<33x128xf32>
    %8 = vector.extract_strided_slice %7 {offsets = [0, 0], sizes = [32, 128], strides = [1, 1]} : vector<33x128xf32> to vector<32x128xf32>
    %9 = vector.extract_strided_slice %7 {offsets = [32, 0], sizes = [1, 128], strides = [1, 1]} : vector<33x128xf32> to vector<1x128xf32>
    %c0_9 = arith.constant 0 : index
    %c0_10 = arith.constant 0 : index
    %c0_11 = arith.constant 0 : index
    %10 = vector.load %arg2[%c0_9, %c0_10, %c0_11] : memref<2x8x1xf32, #tpu.memory_space<vmem>>, vector<1x8x1xf32>
    %11 = vector.shape_cast %10 : vector<1x8x1xf32> to vector<8x1xf32>
    %12 = vector.broadcast %11 : vector<8x1xf32> to vector<8x128xf32>
    %13 = vector.broadcast %9 : vector<1x128xf32> to vector<8x128xf32>
    %14 = arith.addf %12, %13 : vector<8x128xf32>
    %cst_12 = arith.constant 2.000000e-01 : f32
    %15 = vector.broadcast %cst_12 : f32 to vector<8x128xf32>
    %16 = arith.mulf %15, %14 : vector<8x128xf32>
    %17 = arith.maximumf %14, %16 : vector<8x128xf32>
    %c0_13 = arith.constant 0 : index
    %c0_14 = arith.constant 0 : index
    %c0_15 = arith.constant 0 : index
    %18 = vector.load %arg1[%c0_13, %c0_14, %c0_15] : memref<2x8x128xi8, #tpu.memory_space<vmem>>, vector<1x8x128xi8>
    %19 = vector.shape_cast %18 : vector<1x8x128xi8> to vector<8x128xi8>
    %20 = arith.sitofp %19 : vector<8x128xi8> to vector<8x128xf32>
    %cst_16 = arith.constant 0.000000e+00 : f32
    %21 = vector.broadcast %cst_16 : f32 to vector<8x128xf32>
    %22 = arith.cmpf ogt, %20, %21 : vector<8x128xf32>
    %cst_17 = arith.constant -1.000000e+30 : f32
    %23 = vector.broadcast %cst_17 : f32 to vector<8x128xf32>
    %24 = arith.select %22, %17, %23 : vector<8x128xi1>, vector<8x128xf32>
    %cst_18 = arith.constant dense<0xFF800000> : vector<8xf32>
    %25 = vector.multi_reduction <maximumf>, %24, %cst_18 [1] : vector<8x128xf32> to vector<8xf32>
    %26 = vector.shape_cast %25 : vector<8xf32> to vector<8x1xf32>
    %27 = vector.broadcast %26 : vector<8x1xf32> to vector<8x128xf32>
    %28 = arith.subf %24, %27 : vector<8x128xf32>
    %29 = math.exp %28 : vector<8x128xf32>
    %cst_19 = arith.constant 0.000000e+00 : f32
    %30 = vector.broadcast %cst_19 : f32 to vector<8x128xf32>
    %31 = arith.select %22, %29, %30 : vector<8x128xi1>, vector<8x128xf32>
    %cst_20 = arith.constant dense<0.000000e+00> : vector<8xf32>
    %32 = vector.multi_reduction <add>, %31, %cst_20 [1] : vector<8x128xf32> to vector<8xf32>
    %33 = vector.shape_cast %32 : vector<8xf32> to vector<8x1xf32>
    %cst_21 = arith.constant 0.000000e+00 : f32
    %34 = vector.broadcast %cst_21 : f32 to vector<8x1xf32>
    %35 = arith.cmpf ogt, %33, %34 : vector<8x1xf32>
    %cst_22 = arith.constant 1.000000e+00 : f32
    %36 = vector.broadcast %cst_22 : f32 to vector<8x1xf32>
    %37 = arith.select %35, %33, %36 : vector<8x1xi1>, vector<8x1xf32>
    %38 = vector.broadcast %37 : vector<8x1xf32> to vector<8x128xf32>
    %39 = arith.divf %31, %38 : vector<8x128xf32>
    %cst_23 = arith.constant dense<0.000000e+00> : vector<8x32xf32>
    %40 = tpu.matmul %39, %8, %cst_23 {dimension_numbers = #tpu.dot_dimension_numbers<[1], [1], [0], [0], [0, 0, 1, 0], [], []>} : vector<8x128xf32>, vector<32x128xf32>, vector<8x32xf32> -> vector<8x32xf32>
    %41 = vector.extract_strided_slice %6 {offsets = [0, 0], sizes = [1, 32], strides = [1, 1]} : vector<2x32xf32> to vector<1x32xf32>
    %42 = vector.broadcast %41 : vector<1x32xf32> to vector<8x32xf32>
    %43 = arith.addf %40, %42 : vector<8x32xf32>
    %44 = arith.negf %43 : vector<8x32xf32>
    %45 = math.exp %44 : vector<8x32xf32>
    %cst_24 = arith.constant 1.000000e+00 : f32
    %46 = vector.broadcast %cst_24 : f32 to vector<8x32xf32>
    %47 = arith.addf %46, %45 : vector<8x32xf32>
    %48 = arith.divf %46, %47 : vector<8x32xf32>
    %49 = vector.extract_strided_slice %6 {offsets = [1, 0], sizes = [1, 32], strides = [1, 1]} : vector<2x32xf32> to vector<1x32xf32>
    %50 = vector.broadcast %49 : vector<1x32xf32> to vector<8x32xf32>
    %51 = arith.mulf %48, %50 : vector<8x32xf32>
    %cst_25 = arith.constant dense<0.000000e+00> : vector<8xf32>
    %52 = vector.multi_reduction <add>, %51, %cst_25 [1] : vector<8x32xf32> to vector<8xf32>
    %53 = vector.shape_cast %52 : vector<8xf32> to vector<8x1xf32>
    %54 = arith.addf %0, %53 : vector<8x1xf32>
    %c1 = arith.constant 1 : index
    %c0_26 = arith.constant 0 : index
    %c0_27 = arith.constant 0 : index
    %55 = vector.load %arg0[%c1, %c0_26, %c0_27] : memref<2x8x128xbf16, #tpu.memory_space<vmem>>, vector<1x8x128xbf16>
    %56 = vector.shape_cast %55 : vector<1x8x128xbf16> to vector<8x128xbf16>
    %c1_28 = arith.constant 1 : index
    %c0_29 = arith.constant 0 : index
    %c0_30 = arith.constant 0 : index
    %57 = vector.load %arg3[%c1_28, %c0_29, %c0_30] : memref<2x33x8xbf16, #tpu.memory_space<vmem>>, vector<1x33x8xbf16>
    %58 = vector.shape_cast %57 : vector<1x33x8xbf16> to vector<33x8xbf16>
    %c1_31 = arith.constant 1 : index
    %c0_32 = arith.constant 0 : index
    %c0_33 = arith.constant 0 : index
    %59 = vector.load %arg4[%c1_31, %c0_32, %c0_33] : memref<2x2x32xf32, #tpu.memory_space<vmem>>, vector<1x2x32xf32>
    %60 = vector.shape_cast %59 : vector<1x2x32xf32> to vector<2x32xf32>
    %cst_34 = arith.constant dense<0.000000e+00> : vector<33x128xf32>
    %61 = tpu.matmul %58, %56, %cst_34 {dimension_numbers = #tpu.dot_dimension_numbers<[1], [0], [0], [1], [0, 0, 1, 1], [], []>} : vector<33x8xbf16>, vector<8x128xbf16>, vector<33x128xf32> -> vector<33x128xf32>
    %62 = vector.extract_strided_slice %61 {offsets = [0, 0], sizes = [32, 128], strides = [1, 1]} : vector<33x128xf32> to vector<32x128xf32>
    %63 = vector.extract_strided_slice %61 {offsets = [32, 0], sizes = [1, 128], strides = [1, 1]} : vector<33x128xf32> to vector<1x128xf32>
    %c1_35 = arith.constant 1 : index
    %c0_36 = arith.constant 0 : index
    %c0_37 = arith.constant 0 : index
    %64 = vector.load %arg2[%c1_35, %c0_36, %c0_37] : memref<2x8x1xf32, #tpu.memory_space<vmem>>, vector<1x8x1xf32>
    %65 = vector.shape_cast %64 : vector<1x8x1xf32> to vector<8x1xf32>
    %66 = vector.broadcast %65 : vector<8x1xf32> to vector<8x128xf32>
    %67 = vector.broadcast %63 : vector<1x128xf32> to vector<8x128xf32>
    %68 = arith.addf %66, %67 : vector<8x128xf32>
    %cst_38 = arith.constant 2.000000e-01 : f32
    %69 = vector.broadcast %cst_38 : f32 to vector<8x128xf32>
    %70 = arith.mulf %69, %68 : vector<8x128xf32>
    %71 = arith.maximumf %68, %70 : vector<8x128xf32>
    %c1_39 = arith.constant 1 : index
    %c0_40 = arith.constant 0 : index
    %c0_41 = arith.constant 0 : index
    %72 = vector.load %arg1[%c1_39, %c0_40, %c0_41] : memref<2x8x128xi8, #tpu.memory_space<vmem>>, vector<1x8x128xi8>
    %73 = vector.shape_cast %72 : vector<1x8x128xi8> to vector<8x128xi8>
    %74 = arith.sitofp %73 : vector<8x128xi8> to vector<8x128xf32>
    %cst_42 = arith.constant 0.000000e+00 : f32
    %75 = vector.broadcast %cst_42 : f32 to vector<8x128xf32>
    %76 = arith.cmpf ogt, %74, %75 : vector<8x128xf32>
    %cst_43 = arith.constant -1.000000e+30 : f32
    %77 = vector.broadcast %cst_43 : f32 to vector<8x128xf32>
    %78 = arith.select %76, %71, %77 : vector<8x128xi1>, vector<8x128xf32>
    %cst_44 = arith.constant dense<0xFF800000> : vector<8xf32>
    %79 = vector.multi_reduction <maximumf>, %78, %cst_44 [1] : vector<8x128xf32> to vector<8xf32>
    %80 = vector.shape_cast %79 : vector<8xf32> to vector<8x1xf32>
    %81 = vector.broadcast %80 : vector<8x1xf32> to vector<8x128xf32>
    %82 = arith.subf %78, %81 : vector<8x128xf32>
    %83 = math.exp %82 : vector<8x128xf32>
    %cst_45 = arith.constant 0.000000e+00 : f32
    %84 = vector.broadcast %cst_45 : f32 to vector<8x128xf32>
    %85 = arith.select %76, %83, %84 : vector<8x128xi1>, vector<8x128xf32>
    %cst_46 = arith.constant dense<0.000000e+00> : vector<8xf32>
    %86 = vector.multi_reduction <add>, %85, %cst_46 [1] : vector<8x128xf32> to vector<8xf32>
    %87 = vector.shape_cast %86 : vector<8xf32> to vector<8x1xf32>
    %cst_47 = arith.constant 0.000000e+00 : f32
    %88 = vector.broadcast %cst_47 : f32 to vector<8x1xf32>
    %89 = arith.cmpf ogt, %87, %88 : vector<8x1xf32>
    %cst_48 = arith.constant 1.000000e+00 : f32
    %90 = vector.broadcast %cst_48 : f32 to vector<8x1xf32>
    %91 = arith.select %89, %87, %90 : vector<8x1xi1>, vector<8x1xf32>
    %92 = vector.broadcast %91 : vector<8x1xf32> to vector<8x128xf32>
    %93 = arith.divf %85, %92 : vector<8x128xf32>
    %cst_49 = arith.constant dense<0.000000e+00> : vector<8x32xf32>
    %94 = tpu.matmul %93, %62, %cst_49 {dimension_numbers = #tpu.dot_dimension_numbers<[1], [1], [0], [0], [0, 0, 1, 0], [], []>} : vector<8x128xf32>, vector<32x128xf32>, vector<8x32xf32> -> vector<8x32xf32>
    %95 = vector.extract_strided_slice %60 {offsets = [0, 0], sizes = [1, 32], strides = [1, 1]} : vector<2x32xf32> to vector<1x32xf32>
    %96 = vector.broadcast %95 : vector<1x32xf32> to vector<8x32xf32>
    %97 = arith.addf %94, %96 : vector<8x32xf32>
    %98 = arith.negf %97 : vector<8x32xf32>
    %99 = math.exp %98 : vector<8x32xf32>
    %cst_50 = arith.constant 1.000000e+00 : f32
    %100 = vector.broadcast %cst_50 : f32 to vector<8x32xf32>
    %101 = arith.addf %100, %99 : vector<8x32xf32>
    %102 = arith.divf %100, %101 : vector<8x32xf32>
    %103 = vector.extract_strided_slice %60 {offsets = [1, 0], sizes = [1, 32], strides = [1, 1]} : vector<2x32xf32> to vector<1x32xf32>
    %104 = vector.broadcast %103 : vector<1x32xf32> to vector<8x32xf32>
    %105 = arith.mulf %102, %104 : vector<8x32xf32>
    %cst_51 = arith.constant dense<0.000000e+00> : vector<8xf32>
    %106 = vector.multi_reduction <add>, %105, %cst_51 [1] : vector<8x32xf32> to vector<8xf32>
    %107 = vector.shape_cast %106 : vector<8xf32> to vector<8x1xf32>
    %108 = arith.addf %54, %107 : vector<8x1xf32>
    %c0_52 = arith.constant 0 : index
    %c0_53 = arith.constant 0 : index
    %109 = vector.load %arg5[%c0_52, %c0_53] : memref<8x1xf32, #tpu.memory_space<vmem>>, vector<8x1xf32>
    tpu.vector_store %arg5[%c0_52, %c0_53], %108 {strides = array<i32>} : memref<8x1xf32, #tpu.memory_space<vmem>>, vector<8x1xf32>,
    return
  }
}

</mosaic_0001>

<llo_original>
// kernel: tpu_custom_call.1
$region0: #{tpu_custom_call.1}
  #allocation0 [shape = 'u32[]', space=smem, size = 0x4, offset = 0x4, fixed_abs, tag = 'smem constant byte address 0x4 - core index']
  #allocation1 [shape = 'u32[144,128]{1,0:T(1,128)}', space=vmem, size = 0x12000, scoped, tag = 'internal scratch']
  %s0 = inlined_call_operand.vmem [shape: bf16[2,8,128], index: 0, kind: input, shape index: {}]
  %s1 = inlined_call_operand.vmem [shape: s8[2,8,128], index: 1, kind: input, shape index: {}]
  %s2 = inlined_call_operand.vmem [shape: f32[2,8,1], index: 2, kind: input, shape index: {}]
  %s3 = inlined_call_operand.vmem [shape: bf16[2,33,8], index: 3, kind: input, shape index: {}]
  %s4 = inlined_call_operand.vmem [shape: f32[2,2,32], index: 4, kind: input, shape index: {}]
  %s5 = inlined_call_operand.vmem [shape: f32[8,1], index: 5, kind: output, shape index: {}]
  %s6 = sld [smem:[#allocation0]]
  $region30: #{tpu_custom_call.1} parent=0
    _
  %s8 = ssub.s32 1, %s6
  %s9 = scalar_select 0, %s8, %s6
  // Predicated region
  $region2: #{tpu_custom_call.1} parent=0 // pred_check
    _
  $region3: #{tpu_custom_call.1} parent=0 // pred_check_branch
    %11 = sbr.rel (0) target = $region5
  $region4: #{tpu_custom_call.1} parent=0 // pred_region
    _
  $region5: #{tpu_custom_call.1} parent=0 // pred_fallthru
    _
  // Predicated region
  $region6: #{tpu_custom_call.1} parent=0 // pred_check
    _
  $region7: #{tpu_custom_call.1} parent=0 // pred_check_branch
    %13 = sbr.rel (0) target = $region9
  $region8: #{tpu_custom_call.1} parent=0 // pred_region
    _
  $region9: #{tpu_custom_call.1} parent=0 // pred_fallthru
    _
  // Predicated region
  $region10: #{tpu_custom_call.1} parent=0 // pred_check
    _
  $region11: #{tpu_custom_call.1} parent=0 // pred_check_branch
    %15 = sbr.rel (0) target = $region13
  $region12: #{tpu_custom_call.1} parent=0 // pred_region
    _
  $region13: #{tpu_custom_call.1} parent=0 // pred_fallthru
    _
  // Predicated region
  $region14: #{tpu_custom_call.1} parent=0 // pred_check
    _
  $region15: #{tpu_custom_call.1} parent=0 // pred_check_branch
    %17 = sbr.rel (0) target = $region17
  $region16: #{tpu_custom_call.1} parent=0 // pred_region
    _
  $region17: #{tpu_custom_call.1} parent=0 // pred_fallthru
    _
  // Predicated region
  $region18: #{tpu_custom_call.1} parent=0 // pred_check
    _
  $region19: #{tpu_custom_call.1} parent=0 // pred_check_branch
    %19 = sbr.rel (0) target = $region21
  $region20: #{tpu_custom_call.1} parent=0 // pred_region
    _
  $region21: #{tpu_custom_call.1} parent=0 // pred_fallthru
    _
  %v21 = vld [vmem:[%s0] sm:$0xf]
  %v22 = vld [vmem:[%s3] sm:$0xf]
  %v23 = vld [vmem:[%s3 + $0x4] sm:$0xf]
  %v24 = vld [vmem:[%s3 + $0x8] sm:$0xf]
  %v25 = vld [vmem:[%s3 + $0xc] sm:$0xf]
  %v26 = vld [vmem:[%s3 + $0x10] sm:$0x1]
  %v27 = vld [vmem:[%s4] sm:$0x3]
  %v33 = vunpack.c.l.b16 %v22
  %v34 = vunpack.c.l.b16 %v23
  %v35 = vunpack.c.l.b16 %v24
  %v36 = vunpack.c.l.b16 %v25
  %v37 = vunpack.c.l.b16 %v26
  %v38 = vpack.c.b16 %v34, %v33
  %v39 = vpack.c.b16 %v36, %v35
  %v40 = vpack.c.b16 %v37, %v37
  %vm41 = vcmask 64512
  %v43 = vsel %vm41, %v38, 0
  %v46 = vsel %vm41, %v39, 0
  %v49 = vsel %vm41, %v40, 0
  %vm51 = vcmask 1043456
  %v53 = vsel %vm51, %v21, 0
  %55 = vmatprep.subr.bf16.mxu0 0
  %56 = vmatpush1.bf16.msra.mxu0 0
  %57 = vmatprep.subr.bf16.mxu0 0
  %58 = vmatpush1.bf16.msra.mxu0 0
  %59 = vmatprep.subr.bf16.mxu0 0
  %60 = vmatpush1.bf16.msra.mxu0 0
  %61 = vmatprep.subr.bf16.mxu0 0
  %62 = vmatpush1.bf16.msra.mxu0 0
  %63 = vmatprep.subr.bf16.mxu0 0
  %64 = vmatpush1.bf16.msra.mxu0 0
  %65 = vmatprep.subr.bf16.mxu0 0
  %66 = vmatpush1.bf16.msra.mxu0 0
  %67 = vmatprep.subr.bf16.mxu0 0
  %68 = vmatpush1.bf16.msra.mxu0 0
  %69 = vmatprep.subr.bf16.mxu0 0
  %70 = vmatpush1.bf16.msra.mxu0 %v53
  %71 = vmatprep.subr.bf16.mxu0 0
  %72 = vmatpush2.bf16.msra.mxu0 0
  %73 = vmatprep.subr.bf16.mxu0 0
  %74 = vmatpush2.bf16.msra.mxu0 0
  %75 = vmatprep.subr.bf16.mxu0 0
  %76 = vmatpush2.bf16.msra.mxu0 0
  %77 = vmatprep.subr.bf16.mxu0 0
  %78 = vmatpush2.bf16.msra.mxu0 0
  %79 = vmatprep.subr.bf16.mxu0 0
  %80 = vmatpush2.bf16.msra.mxu0 0
  %81 = vmatprep.subr.bf16.mxu0 0
  %82 = vmatpush2.bf16.msra.mxu0 0
  %83 = vmatprep.subr.bf16.mxu0 0
  %84 = vmatpush2.bf16.msra.mxu0 0
  %85 = vmatprep.subr.bf16.mxu0 0
  %86 = vmatpush2.bf16.msra.mxu0 0
  %87 = vmatprep.mubr.bf16.mxu0 0
  %88 = vmatmul.mubr.bf16.gmra.mxu0 %v43
  %v89 = vpop.f32.mrf.mxu0
  %v90 = vadd.f32 0.0, %v89
  %v91 = vpop.f32.mrf.mxu0
  %v92 = vpop.f32.mrf.mxu0
  %v93 = vadd.f32 0.0, %v92
  %v94 = vpop.f32.mrf.mxu0
  %95 = vmatprep.mubr.bf16.mxu0 0
  %96 = vmatmul.mubr.bf16.gmra.mxu0 %v46
  %v97 = vpop.f32.mrf.mxu0
  %v98 = vadd.f32 0.0, %v97
  %v99 = vpop.f32.mrf.mxu0
  %v100 = vpop.f32.mrf.mxu0
  %v101 = vadd.f32 0.0, %v100
  %v102 = vpop.f32.mrf.mxu0
  %103 = vmatprep.mubr.bf16.mxu0 0
  %104 = vmatmul.mubr.bf16.gmra.mxu0 %v49
  %v105 = vpop.f32.mrf.mxu0
  %v106 = vadd.f32 0.0, %v105
  %v107 = vpop.f32.mrf.mxu0
  %v108 = vpop.f32.mrf.mxu0
  %v109 = vpop.f32.mrf.mxu0
  %110 = vdwg.mxu0
  %v111 = vld [vmem:[%s2] sm:$0xff]
  %113 = vset.pattern.permute.xlu0 0
  %114 = vperm.xlu0 %113, %v111
  %v115 = vpop.permute.xlu0 %114
  %v117 = vlaneseq
  %v118 = vshrl.u32 %v117, 7
  %v119 = vsub.s32 0, %v118
  %v120 = vrot.slane %v106, %v119
  %v121 = vadd.f32 %v115, %v120
  %v122 = vmul.f32 %v121, 0.2
  %v123 = vmax.f32 %v121, %v122
  %v124 = vld [vmem:[%s1] sm:$0x3]
  %v125 = vunpack.c.0.s8 %v124
  %v126 = vcvt.s32.f32 %v125
  %vm127 = vcmp.gt.f32.partialorder %v126, 0.0
  %v128 = vsel %vm127, %v123, -1e+30
  %129 = vmax.xlane.f32.xlu0 %v128
  %v130 = vpop.xlane.xlu0 %129
  %v131 = vsub.f32 %v128, %v130
  %v132 = vmul.f32 %v131, 1.442695
  %v133 = vpow.pop %v132
  %v134 = vsel %vm127, %v133, 0.0
  %135 = vadd.xlane.f32.xlu0 %v134
  %v136 = vpop.xlane.xlu0 %135
  %vm137 = vcmp.gt.f32.partialorder %v136, 0.0
  %v138 = vsel %vm137, %v136, 1.0
  %v139 = vrcp.pop %v138
  %v140 = vmul.f32 %v134, %v139
  %v141 = vlaneseq
  %v142 = vshrl.u32 %v141, 7
  %v143 = vsub.s32 0, %v142
  %v144 = vrot.slane %v27, %v143
  %145 = vmatprep.subr.mxu0 0.0
  %146 = vmatpush1.xpose.msra.mxu0 0.0
  %147 = vmatprep.subr.mxu0 0.0
  %148 = vmatpush1.xpose.msra.mxu0 0.0
  %149 = vmatprep.subr.mxu0 0.0
  %150 = vmatpush1.xpose.msra.mxu0 0.0
  %151 = vmatprep.subr.mxu0 0.0
  %152 = vmatpush1.xpose.msra.mxu0 0.0
  %153 = vmatprep.subr.mxu0 0.0
  %154 = vmatpush1.xpose.msra.mxu0 0.0
  %155 = vmatprep.subr.mxu0 0.0
  %156 = vmatpush1.xpose.msra.mxu0 0.0
  %157 = vmatprep.subr.mxu0 0.0
  %158 = vmatpush1.xpose.msra.mxu0 0.0
  %159 = vmatprep.subr.mxu0 0.0
  %160 = vmatpush1.xpose.msra.mxu0 0.0
  %161 = vmatprep.subr.mxu0 0.0
  %162 = vmatpush1.xpose.msra.mxu0 0.0
  %163 = vmatprep.subr.mxu0 0.0
  %164 = vmatpush1.xpose.msra.mxu0 0.0
  %165 = vmatprep.subr.mxu0 0.0
  %166 = vmatpush1.xpose.msra.mxu0 0.0
  %167 = vmatprep.subr.mxu0 0.0
  %168 = vmatpush1.xpose.msra.mxu0 0.0
  %169 = vmatprep.subr.mxu0 0.0
  %170 = vmatpush1.xpose.msra.mxu0 %v101
  %171 = vmatprep.subr.mxu0 0.0
  %172 = vmatpush1.xpose.msra.mxu0 %v98
  %173 = vmatprep.subr.mxu0 0.0
  %174 = vmatpush1.xpose.msra.mxu0 %v93
  %175 = vmatprep.subr.mxu0 0.0
  %176 = vmatpush1.xpose.msra.mxu0 %v90
  %177 = vmatprep.subr.mxu0 0.0
  %178 = vmatpush2.xpose.msra.mxu0 0.0
  %179 = vmatprep.subr.mxu0 0.0
  %180 = vmatpush2.xpose.msra.mxu0 0.0
  %181 = vmatprep.subr.mxu0 0.0
  %182 = vmatpush2.xpose.msra.mxu0 0.0
  %183 = vmatprep.subr.mxu0 0.0
  %184 = vmatpush2.xpose.msra.mxu0 0.0
  %185 = vmatprep.subr.mxu0 0.0
  %186 = vmatpush2.xpose.msra.mxu0 0.0
  %187 = vmatprep.subr.mxu0 0.0
  %188 = vmatpush2.xpose.msra.mxu0 0.0
  %189 = vmatprep.subr.mxu0 0.0
  %190 = vmatpush2.xpose.msra.mxu0 0.0
  %191 = vmatprep.subr.mxu0 0.0
  %192 = vmatpush2.xpose.msra.mxu0 0.0
  %193 = vmatprep.subr.mxu0 0.0
  %194 = vmatpush2.xpose.msra.mxu0 0.0
  %195 = vmatprep.subr.mxu0 0.0
  %196 = vmatpush2.xpose.msra.mxu0 0.0
  %197 = vmatprep.subr.mxu0 0.0
  %198 = vmatpush2.xpose.msra.mxu0 0.0
  %199 = vmatprep.subr.mxu0 0.0
  %200 = vmatpush2.xpose.msra.mxu0 0.0
  %201 = vmatprep.subr.mxu0 0.0
  %202 = vmatpush2.xpose.msra.mxu0 0.0
  %203 = vmatprep.subr.mxu0 0.0
  %204 = vmatpush2.xpose.msra.mxu0 0.0
  %205 = vmatprep.subr.mxu0 0.0
  %206 = vmatpush2.xpose.msra.mxu0 0.0
  %207 = vmatprep.subr.mxu0 0.0
  %208 = vmatpush2.xpose.msra.mxu0 0.0
  %209 = vmatprep.mubr.f32.mxu0 0.0
  %210 = vmatmul.mubr.f32.gmra.mxu0 %v140
  %v211 = vpop.f32.mrf.mxu0
  %v212 = vadd.f32 %v144, %v211
  %v213 = vpop.f32.mrf.mxu0
  %214 = vdwg.mxu0
  %v215 = vxor.u32 %v212, 2147483648
  %v216 = vmul.f32 %v215, 1.442695
  %v217 = vpow.pop %v216
  %v218 = vadd.f32 %v217, 1.0
  %v219 = vrcp.pop %v218
  %v220 = vmul.f32 1.0, %v219
  %v221 = vlaneseq
  %v222 = vshrl.u32 %v221, 7
  %v223 = vsub.s32 1, %v222
  %v224 = vrot.slane %v27, %v223
  %v225 = vmul.f32 %v220, %v224
  %vm226 = vcmask 261120
  %v227 = vsel %vm226, %v225, 0.0
  %228 = vadd.xlane.f32.xlu0 %v227
  %v229 = vpop.xlane.xlu0 %228
  %v230 = vadd.f32 %v229, 0.0
  %s231 = scalar_lea.vmem %s0, 4
  %v232 = vld [vmem:[%s231] sm:$0xf]
  %s233 = scalar_lea.vmem %s3, 20
  %v234 = vld [vmem:[%s233] sm:$0xf]
  %v235 = vld [vmem:[%s233 + $0x4] sm:$0xf]
  %v236 = vld [vmem:[%s233 + $0x8] sm:$0xf]
  %v237 = vld [vmem:[%s233 + $0xc] sm:$0xf]
  %v238 = vld [vmem:[%s233 + $0x10] sm:$0x1]
  %s239 = scalar_lea.vmem %s4, 2
  %v240 = vld [vmem:[%s239] sm:$0x3]
  %v246 = vunpack.c.l.b16 %v234
  %v247 = vunpack.c.l.b16 %v235
  %v248 = vunpack.c.l.b16 %v236
  %v249 = vunpack.c.l.b16 %v237
  %v250 = vunpack.c.l.b16 %v238
  %v251 = vpack.c.b16 %v247, %v246
  %v252 = vpack.c.b16 %v249, %v248
  %v253 = vpack.c.b16 %v250, %v250
  %v255 = vsel %vm41, %v251, 0
  %v258 = vsel %vm41, %v252, 0
  %v261 = vsel %vm41, %v253, 0
  %v264 = vsel %vm51, %v232, 0
  %266 = vmatprep.subr.bf16.mxu0 0
  %267 = vmatpush1.bf16.msra.mxu0 0
  %268 = vmatprep.subr.bf16.mxu0 0
  %269 = vmatpush1.bf16.msra.mxu0 0
  %270 = vmatprep.subr.bf16.mxu0 0
  %271 = vmatpush1.bf16.msra.mxu0 0
  %272 = vmatprep.subr.bf16.mxu0 0
  %273 = vmatpush1.bf16.msra.mxu0 0
  %274 = vmatprep.subr.bf16.mxu0 0
  %275 = vmatpush1.bf16.msra.mxu0 0
  %276 = vmatprep.subr.bf16.mxu0 0
  %277 = vmatpush1.bf16.msra.mxu0 0
  %278 = vmatprep.subr.bf16.mxu0 0
  %279 = vmatpush1.bf16.msra.mxu0 0
  %280 = vmatprep.subr.bf16.mxu0 0
  %281 = vmatpush1.bf16.msra.mxu0 %v264
  %282 = vmatprep.subr.bf16.mxu0 0
  %283 = vmatpush2.bf16.msra.mxu0 0
  %284 = vmatprep.subr.bf16.mxu0 0
  %285 = vmatpush2.bf16.msra.mxu0 0
  %286 = vmatprep.subr.bf16.mxu0 0
  %287 = vmatpush2.bf16.msra.mxu0 0
  %288 = vmatprep.subr.bf16.mxu0 0
  %289 = vmatpush2.bf16.msra.mxu0 0
  %290 = vmatprep.subr.bf16.mxu0 0
  %291 = vmatpush2.bf16.msra.mxu0 0
  %292 = vmatprep.subr.bf16.mxu0 0
  %293 = vmatpush2.bf16.msra.mxu0 0
  %294 = vmatprep.subr.bf16.mxu0 0
  %295 = vmatpush2.bf16.msra.mxu0 0
  %296 = vmatprep.subr.bf16.mxu0 0
  %297 = vmatpush2.bf16.msra.mxu0 0
  %298 = vmatprep.mubr.bf16.mxu0 0
  %299 = vmatmul.mubr.bf16.gmra.mxu0 %v255
  %v300 = vpop.f32.mrf.mxu0
  %v301 = vadd.f32 0.0, %v300
  %v302 = vpop.f32.mrf.mxu0
  %v303 = vpop.f32.mrf.mxu0
  %v304 = vadd.f32 0.0, %v303
  %v305 = vpop.f32.mrf.mxu0
  %306 = vmatprep.mubr.bf16.mxu0 0
  %307 = vmatmul.mubr.bf16.gmra.mxu0 %v258
  %v308 = vpop.f32.mrf.mxu0
  %v309 = vadd.f32 0.0, %v308
  %v310 = vpop.f32.mrf.mxu0
  %v311 = vpop.f32.mrf.mxu0
  %v312 = vadd.f32 0.0, %v311
  %v313 = vpop.f32.mrf.mxu0
  %314 = vmatprep.mubr.bf16.mxu0 0
  %315 = vmatmul.mubr.bf16.gmra.mxu0 %v261
  %v316 = vpop.f32.mrf.mxu0
  %v317 = vadd.f32 0.0, %v316
  %v318 = vpop.f32.mrf.mxu0
  %v319 = vpop.f32.mrf.mxu0
  %v320 = vpop.f32.mrf.mxu0
  %321 = vdwg.mxu0
  %s322 = scalar_lea.vmem %s2, 8
  %v323 = vld [vmem:[%s322] sm:$0xff]
  %325 = vset.pattern.permute.xlu0 0
  %326 = vperm.xlu0 %325, %v323
  %v327 = vpop.permute.xlu0 %326
  %v329 = vlaneseq
  %v330 = vshrl.u32 %v329, 7
  %v331 = vsub.s32 0, %v330
  %v332 = vrot.slane %v317, %v331
  %v333 = vadd.f32 %v327, %v332
  %v334 = vmul.f32 %v333, 0.2
  %v335 = vmax.f32 %v333, %v334
  %s336 = scalar_lea.vmem %s1, 2
  %v337 = vld [vmem:[%s336] sm:$0x3]
  %v338 = vunpack.c.0.s8 %v337
  %v339 = vcvt.s32.f32 %v338
  %vm340 = vcmp.gt.f32.partialorder %v339, 0.0
  %v341 = vsel %vm340, %v335, -1e+30
  %342 = vmax.xlane.f32.xlu0 %v341
  %v343 = vpop.xlane.xlu0 %342
  %v344 = vsub.f32 %v341, %v343
  %v345 = vmul.f32 %v344, 1.442695
  %v346 = vpow.pop %v345
  %v347 = vsel %vm340, %v346, 0.0
  %348 = vadd.xlane.f32.xlu0 %v347
  %v349 = vpop.xlane.xlu0 %348
  %vm350 = vcmp.gt.f32.partialorder %v349, 0.0
  %v351 = vsel %vm350, %v349, 1.0
  %v352 = vrcp.pop %v351
  %v353 = vmul.f32 %v347, %v352
  %v354 = vlaneseq
  %v355 = vshrl.u32 %v354, 7
  %v356 = vsub.s32 0, %v355
  %v357 = vrot.slane %v240, %v356
  %358 = vmatprep.subr.mxu0 0.0
  %359 = vmatpush1.xpose.msra.mxu0 0.0
  %360 = vmatprep.subr.mxu0 0.0
  %361 = vmatpush1.xpose.msra.mxu0 0.0
  %362 = vmatprep.subr.mxu0 0.0
  %363 = vmatpush1.xpose.msra.mxu0 0.0
  %364 = vmatprep.subr.mxu0 0.0
  %365 = vmatpush1.xpose.msra.mxu0 0.0
  %366 = vmatprep.subr.mxu0 0.0
  %367 = vmatpush1.xpose.msra.mxu0 0.0
  %368 = vmatprep.subr.mxu0 0.0
  %369 = vmatpush1.xpose.msra.mxu0 0.0
  %370 = vmatprep.subr.mxu0 0.0
  %371 = vmatpush1.xpose.msra.mxu0 0.0
  %372 = vmatprep.subr.mxu0 0.0
  %373 = vmatpush1.xpose.msra.mxu0 0.0
  %374 = vmatprep.subr.mxu0 0.0
  %375 = vmatpush1.xpose.msra.mxu0 0.0
  %376 = vmatprep.subr.mxu0 0.0
  %377 = vmatpush1.xpose.msra.mxu0 0.0
  %378 = vmatprep.subr.mxu0 0.0
  %379 = vmatpush1.xpose.msra.mxu0 0.0
  %380 = vmatprep.subr.mxu0 0.0
  %381 = vmatpush1.xpose.msra.mxu0 0.0
  %382 = vmatprep.subr.mxu0 0.0
  %383 = vmatpush1.xpose.msra.mxu0 %v312
  %384 = vmatprep.subr.mxu0 0.0
  %385 = vmatpush1.xpose.msra.mxu0 %v309
  %386 = vmatprep.subr.mxu0 0.0
  %387 = vmatpush1.xpose.msra.mxu0 %v304
  %388 = vmatprep.subr.mxu0 0.0
  %389 = vmatpush1.xpose.msra.mxu0 %v301
  %390 = vmatprep.subr.mxu0 0.0
  %391 = vmatpush2.xpose.msra.mxu0 0.0
  %392 = vmatprep.subr.mxu0 0.0
  %393 = vmatpush2.xpose.msra.mxu0 0.0
  %394 = vmatprep.subr.mxu0 0.0
  %395 = vmatpush2.xpose.msra.mxu0 0.0
  %396 = vmatprep.subr.mxu0 0.0
  %397 = vmatpush2.xpose.msra.mxu0 0.0
  %398 = vmatprep.subr.mxu0 0.0
  %399 = vmatpush2.xpose.msra.mxu0 0.0
  %400 = vmatprep.subr.mxu0 0.0
  %401 = vmatpush2.xpose.msra.mxu0 0.0
  %402 = vmatprep.subr.mxu0 0.0
  %403 = vmatpush2.xpose.msra.mxu0 0.0
  %404 = vmatprep.subr.mxu0 0.0
  %405 = vmatpush2.xpose.msra.mxu0 0.0
  %406 = vmatprep.subr.mxu0 0.0
  %407 = vmatpush2.xpose.msra.mxu0 0.0
  %408 = vmatprep.subr.mxu0 0.0
  %409 = vmatpush2.xpose.msra.mxu0 0.0
  %410 = vmatprep.subr.mxu0 0.0
  %411 = vmatpush2.xpose.msra.mxu0 0.0
  %412 = vmatprep.subr.mxu0 0.0
  %413 = vmatpush2.xpose.msra.mxu0 0.0
  %414 = vmatprep.subr.mxu0 0.0
  %415 = vmatpush2.xpose.msra.mxu0 0.0
  %416 = vmatprep.subr.mxu0 0.0
  %417 = vmatpush2.xpose.msra.mxu0 0.0
  %418 = vmatprep.subr.mxu0 0.0
  %419 = vmatpush2.xpose.msra.mxu0 0.0
  %420 = vmatprep.subr.mxu0 0.0
  %421 = vmatpush2.xpose.msra.mxu0 0.0
  %422 = vmatprep.mubr.f32.mxu0 0.0
  %423 = vmatmul.mubr.f32.gmra.mxu0 %v353
  %v424 = vpop.f32.mrf.mxu0
  %v425 = vadd.f32 %v357, %v424
  %v426 = vpop.f32.mrf.mxu0
  %427 = vdwg.mxu0
  %v428 = vxor.u32 %v425, 2147483648
  %v429 = vmul.f32 %v428, 1.442695
  %v430 = vpow.pop %v429
  %v431 = vadd.f32 %v430, 1.0
  %v432 = vrcp.pop %v431
  %v433 = vmul.f32 1.0, %v432
  %v434 = vlaneseq
  %v435 = vshrl.u32 %v434, 7
  %v436 = vsub.s32 1, %v435
  %v437 = vrot.slane %v240, %v436
  %v438 = vmul.f32 %v433, %v437
  %v439 = vsel %vm226, %v438, 0.0
  %440 = vadd.xlane.f32.xlu0 %v439
  %v441 = vpop.xlane.xlu0 %440
  %v442 = vadd.f32 %v230, %v441
  %vm443 = vcmask 7168
  %444 = vst.msk [vmem:[%s5] sm:$0xff] %vm443, %v442
  // Predicated region
  $region22: #{tpu_custom_call.1} parent=0 // pred_check
    _
  $region23: #{tpu_custom_call.1} parent=0 // pred_check_branch
    %446 = sbr.rel (0) target = $region25
  $region24: #{tpu_custom_call.1} parent=0 // pred_region
    _
  $region25: #{tpu_custom_call.1} parent=0 // pred_fallthru
    _
  // Predicated region
  $region26: #{tpu_custom_call.1} parent=0 // pred_check
    _
  $region27: #{tpu_custom_call.1} parent=0 // pred_check_branch
    %448 = sbr.rel (0) target = $region29
  $region28: #{tpu_custom_call.1} parent=0 // pred_region
    _
  $region29: #{tpu_custom_call.1} parent=0 // pred_fallthru
    _

</llo_original>
